<compile_context>
chip_gen: v6e
topology: v6e:2x2x1
jax: 0.10.0
libtpu: 0.0.40
codegen_flags: <defaults>
</compile_context>

<pallas_src>
import functools

import jax
import jax.numpy as jnp
from jax.experimental import pallas as pl
from jax.experimental.pallas import tpu as pltpu

IN_F = 28 * 28      # 784 (multiple of 16, legal as a full-extent last block dim)
HID = 100
HID_PAD = 128       # hidden width padded to a lane-dense 128
OUT_F = 10
OUT_PAD = 16        # narrow padded output (block last dim == full array dim is legal)


def _mlp_kernel(x_ref, w0_ref, b0_ref, w1_ref, b1_ref, w2_ref, b2_ref, o_ref):
    # x streamed as f32 straight from the caller; cast to bf16 on-chip.
    x = x_ref[...].astype(jnp.bfloat16)                                    # (tb, 784)
    # Layer 0: (tb,784)bf16 @ (784,128)bf16 -> f32; bias + ReLU in f32.
    h0 = jnp.dot(x, w0_ref[...], preferred_element_type=jnp.float32)
    h0 = jnp.maximum(h0 + b0_ref[...], 0.0).astype(jnp.bfloat16)
    # Layer 1: (tb,128) @ (128,128)
    h1 = jnp.dot(h0, w1_ref[...], preferred_element_type=jnp.float32)
    h1 = jnp.maximum(h1 + b1_ref[...], 0.0).astype(jnp.bfloat16)
    # Layer 2: (tb,128) @ (128,16), no activation.
    out = jnp.dot(h1, w2_ref[...], preferred_element_type=jnp.float32) + b2_ref[...]
    o_ref[...] = out.astype(o_ref.dtype)


def _round_up(n, m):
    return ((n + m - 1) // m) * m


def init_params(key):
    """Deterministic init mimicking nn.Linear default (uniform +-1/sqrt(fan_in)).

    Weights are stored as (in_features, out_features) so the hot path is x @ W + b."""
    ks = jax.random.split(key, 6)

    def linear(kw, kb, fan_in, fan_out):
        bound = 1.0 / jnp.sqrt(float(fan_in))
        w = jax.random.uniform(kw, (fan_in, fan_out), jnp.float32, -bound, bound)
        b = jax.random.uniform(kb, (1, fan_out), jnp.float32, -bound, bound)
        return w, b

    w0, b0 = linear(ks[0], ks[1], IN_F, HID)
    w1, b1 = linear(ks[2], ks[3], HID, HID)
    w2, b2 = linear(ks[4], ks[5], HID, OUT_F)
    return (w0, b0, w1, b1, w2, b2)


def prep_params(params):
    """Zero-pad hidden/output feature dims; weights -> bf16, biases stay f32.

    Zero padding is numerically exact: ReLU(0)=0 and zero rows/columns contribute
    nothing to the contractions.  The 784 contraction dim is NOT padded."""
    w0, b0, w1, b1, w2, b2 = params

    def pad2d(a, rows, cols):
        return jnp.pad(a, ((0, rows - a.shape[0]), (0, cols - a.shape[1])))

    w0p = pad2d(w0, IN_F, HID_PAD).astype(jnp.bfloat16)      # (784, 128)
    b0p = pad2d(b0, 1, HID_PAD).astype(jnp.float32)          # (1, 128)
    w1p = pad2d(w1, HID_PAD, HID_PAD).astype(jnp.bfloat16)   # (128, 128)
    b1p = pad2d(b1, 1, HID_PAD).astype(jnp.float32)          # (1, 128)
    w2p = pad2d(w2, HID_PAD, OUT_PAD).astype(jnp.bfloat16)   # (128, 16)
    b2p = pad2d(b2, 1, OUT_PAD).astype(jnp.float32)          # (1, 16)
    return (w0p, b0p, w1p, b1p, w2p, b2p)


@functools.partial(jax.jit, static_argnames=("block_b",))
def mlp_forward(x, padded_params, block_b=1024):
    """x: any shape whose trailing dims flatten to 784 (mirrors x.view(-1, 784))."""
    w0p, b0p, w1p, b1p, w2p, b2p = padded_params
    x2d = x.reshape(-1, IN_F)        # free reshape; no pad, no cast pass over x
    B = x2d.shape[0]

    # Batch tile: multiple of 8 (f32 sublanes).  No batch padding -- the ragged final
    # block is masked by Pallas (safe: each output row depends only on its own input
    # row; do NOT add cross-row ops without restoring explicit zero padding).
    tb = min(_round_up(block_b, 8), _round_up(B, 8))
    if B >= 32:
        # Ensure >= 2 grid steps so ("parallel",) can shard across v7x's two TCs and
        # the software pipeline has something to overlap.
        tb = min(tb, _round_up(-(-B // 2), 8))
    grid = (pl.cdiv(B, tb),)

    def const(shape):
        # Weights / biases: same block every grid step -> resident in VMEM.
        return pl.BlockSpec(shape, lambda i: (0, 0))

    out = pl.pallas_call(
        _mlp_kernel,
        out_shape=jax.ShapeDtypeStruct((B, OUT_PAD), jnp.float32),
        grid=grid,
        in_specs=[
            pl.BlockSpec((tb, IN_F), lambda i: (i, 0)),
            const((IN_F, HID_PAD)), const((1, HID_PAD)),
            const((HID_PAD, HID_PAD)), const((1, HID_PAD)),
            const((HID_PAD, OUT_PAD)), const((1, OUT_PAD)),
        ],
        out_specs=pl.BlockSpec((tb, OUT_PAD), lambda i: (i, 0)),
        compiler_params=pltpu.CompilerParams(
            dimension_semantics=("parallel",),
        ),
    )(x2d, w0p, b0p, w1p, b1p, w2p, b2p)

    # Drop the zero-padded output columns (16 -> 10); tiny array, negligible traffic.
    return out[:, :OUT_F]


def _reference(x, params):
    w0, b0, w1, b1, w2, b2 = params
    xr = x.reshape(-1, IN_F)
    h = jnp.maximum(xr @ w0 + b0, 0.0)
    h = jnp.maximum(h @ w1 + b1, 0.0)
    return h @ w2 + b2


if __name__ == "__main__":
    key = jax.random.PRNGKey(0)
    kp, kx1, kx2 = jax.random.split(key, 3)

    params = init_params(kp)
    padded = prep_params(params)

    # Small MNIST-like batch: (B, 1, 28, 28); forward flattens to (B, 784).
    x_small = jax.random.normal(kx1, (2, 1, 28, 28), jnp.float32)
    out_small = jax.block_until_ready(mlp_forward(x_small, padded))
    assert out_small.shape == (2, 10), out_small.shape
    ref_small = _reference(x_small, params)
    assert jnp.allclose(out_small, ref_small, atol=5e-2, rtol=5e-2), float(
        jnp.max(jnp.abs(out_small - ref_small)))

    # Larger batch: exercises the 2-step grid cap (megacore) and the ragged final block.
    x_big = jax.random.normal(kx2, (600, 1, 28, 28), jnp.float32)
    out_big = jax.block_until_ready(mlp_forward(x_big, padded))
    assert out_big.shape == (600, 10), out_big.shape
    ref_big = _reference(x_big, params)
    assert jnp.allclose(out_big, ref_big, atol=5e-2, rtol=5e-2), float(
        jnp.max(jnp.abs(out_big - ref_big)))

    print("KERNEL_OK")
</pallas_src>

<mosaic_0001>
module attributes {stable_mosaic.version = 11 : i64} {
  func.func @_mlp_kernel(%arg0: i32, %arg1: memref<8x784xf32, #tpu.memory_space<vmem>>, %arg2: memref<784x128xbf16, #tpu.memory_space<vmem>>, %arg3: memref<1x128xf32, #tpu.memory_space<vmem>>, %arg4: memref<128x128xbf16, #tpu.memory_space<vmem>>, %arg5: memref<1x128xf32, #tpu.memory_space<vmem>>, %arg6: memref<128x16xbf16, #tpu.memory_space<vmem>>, %arg7: memref<1x16xf32, #tpu.memory_space<vmem>>, %arg8: memref<8x16xf32, #tpu.memory_space<vmem>>) attributes {dimension_semantics = [#tpu.dimension_semantics<parallel>], iteration_bounds = array<i64: 1>, scalar_prefetch = 0 : i64, scratch_operands = 0 : i64, tpu.core_type = #tpu.core_type<tc>, window_params = [{transform_indices = @transform_0, window_bounds = array<i64: 8, 784>}, {pipeline_mode = #tpu.pipeline_mode<synchronous>, transform_indices = @transform_1, window_bounds = array<i64: 784, 128>}, {pipeline_mode = #tpu.pipeline_mode<synchronous>, transform_indices = @transform_2, window_bounds = array<i64: 1, 128>}, {pipeline_mode = #tpu.pipeline_mode<synchronous>, transform_indices = @transform_3, window_bounds = array<i64: 128, 128>}, {pipeline_mode = #tpu.pipeline_mode<synchronous>, transform_indices = @transform_4, window_bounds = array<i64: 1, 128>}, {pipeline_mode = #tpu.pipeline_mode<synchronous>, transform_indices = @transform_5, window_bounds = array<i64: 128, 16>}, {pipeline_mode = #tpu.pipeline_mode<synchronous>, transform_indices = @transform_6, window_bounds = array<i64: 1, 16>}, {transform_indices = @transform_7, window_bounds = array<i64: 8, 16>}]} {
    %c0 = arith.constant 0 : index
    %c0_0 = arith.constant 0 : index
    %0 = vector.load %arg1[%c0, %c0_0] : memref<8x784xf32, #tpu.memory_space<vmem>>, vector<8x784xf32>
    %1 = arith.truncf %0 : vector<8x784xf32> to vector<8x784xbf16>
    %c0_1 = arith.constant 0 : index
    %c0_2 = arith.constant 0 : index
    %2 = vector.load %arg2[%c0_1, %c0_2] : memref<784x128xbf16, #tpu.memory_space<vmem>>, vector<784x128xbf16>
    %cst = arith.constant dense<0.000000e+00> : vector<8x128xf32>
    %3 = tpu.matmul %1, %2, %cst {dimension_numbers = #tpu.dot_dimension_numbers<[1], [0], [0], [1], [0, 0, 1, 1], [], []>} : vector<8x784xbf16>, vector<784x128xbf16>, vector<8x128xf32> -> vector<8x128xf32>
    %c0_3 = arith.constant 0 : index
    %c0_4 = arith.constant 0 : index
    %4 = vector.load %arg3[%c0_3, %c0_4] : memref<1x128xf32, #tpu.memory_space<vmem>>, vector<1x128xf32>
    %5 = vector.broadcast %4 : vector<1x128xf32> to vector<8x128xf32>
    %6 = arith.addf %3, %5 : vector<8x128xf32>
    %cst_5 = arith.constant 0.000000e+00 : f32
    %7 = vector.broadcast %cst_5 : f32 to vector<8x128xf32>
    %8 = arith.maximumf %6, %7 : vector<8x128xf32>
    %9 = arith.truncf %8 : vector<8x128xf32> to vector<8x128xbf16>
    %c0_6 = arith.constant 0 : index
    %c0_7 = arith.constant 0 : index
    %10 = vector.load %arg4[%c0_6, %c0_7] : memref<128x128xbf16, #tpu.memory_space<vmem>>, vector<128x128xbf16>
    %cst_8 = arith.constant dense<0.000000e+00> : vector<8x128xf32>
    %11 = tpu.matmul %9, %10, %cst_8 {dimension_numbers = #tpu.dot_dimension_numbers<[1], [0], [0], [1], [0, 0, 1, 1], [], []>} : vector<8x128xbf16>, vector<128x128xbf16>, vector<8x128xf32> -> vector<8x128xf32>
    %c0_9 = arith.constant 0 : index
    %c0_10 = arith.constant 0 : index
    %12 = vector.load %arg5[%c0_9, %c0_10] : memref<1x128xf32, #tpu.memory_space<vmem>>, vector<1x128xf32>
    %13 = vector.broadcast %12 : vector<1x128xf32> to vector<8x128xf32>
    %14 = arith.addf %11, %13 : vector<8x128xf32>
    %cst_11 = arith.constant 0.000000e+00 : f32
    %15 = vector.broadcast %cst_11 : f32 to vector<8x128xf32>
    %16 = arith.maximumf %14, %15 : vector<8x128xf32>
    %17 = arith.truncf %16 : vector<8x128xf32> to vector<8x128xbf16>
    %c0_12 = arith.constant 0 : index
    %c0_13 = arith.constant 0 : index
    %18 = vector.load %arg6[%c0_12, %c0_13] : memref<128x16xbf16, #tpu.memory_space<vmem>>, vector<128x16xbf16>
    %cst_14 = arith.constant dense<0.000000e+00> : vector<8x16xf32>
    %19 = tpu.matmul %17, %18, %cst_14 {dimension_numbers = #tpu.dot_dimension_numbers<[1], [0], [0], [1], [0, 0, 1, 1], [], []>} : vector<8x128xbf16>, vector<128x16xbf16>, vector<8x16xf32> -> vector<8x16xf32>
    %c0_15 = arith.constant 0 : index
    %c0_16 = arith.constant 0 : index
    %20 = vector.load %arg7[%c0_15, %c0_16] : memref<1x16xf32, #tpu.memory_space<vmem>>, vector<1x16xf32>
    %21 = vector.broadcast %20 : vector<1x16xf32> to vector<8x16xf32>
    %22 = arith.addf %19, %21 : vector<8x16xf32>
    %c0_17 = arith.constant 0 : index
    %c0_18 = arith.constant 0 : index
    %23 = vector.load %arg8[%c0_17, %c0_18] : memref<8x16xf32, #tpu.memory_space<vmem>>, vector<8x16xf32>
    tpu.vector_store %arg8[%c0_17, %c0_18], %22 {strides = array<i32>} : memref<8x16xf32, #tpu.memory_space<vmem>>, vector<8x16xf32>,
    return
  }
  func.func @transform_0(%arg0: i32) -> (i32, i32) {
    %c0_i32 = arith.constant 0 : i32
    %c0_i32_0 = arith.constant 0 : i32
    return %arg0, %c0_i32 : i32, i32
  }
  func.func @transform_1(%arg0: i32) -> (i32, i32) {
    %c0_i32 = arith.constant 0 : i32
    %c0_i32_0 = arith.constant 0 : i32
    %c0_i32_1 = arith.constant 0 : i32
    return %c0_i32, %c0_i32_0 : i32, i32
  }
  func.func @transform_2(%arg0: i32) -> (i32, i32) {
    %c0_i32 = arith.constant 0 : i32
    %c0_i32_0 = arith.constant 0 : i32
    %c0_i32_1 = arith.constant 0 : i32
    return %c0_i32, %c0_i32_0 : i32, i32
  }
  func.func @transform_3(%arg0: i32) -> (i32, i32) {
    %c0_i32 = arith.constant 0 : i32
    %c0_i32_0 = arith.constant 0 : i32
    %c0_i32_1 = arith.constant 0 : i32
    return %c0_i32, %c0_i32_0 : i32, i32
  }
  func.func @transform_4(%arg0: i32) -> (i32, i32) {
    %c0_i32 = arith.constant 0 : i32
    %c0_i32_0 = arith.constant 0 : i32
    %c0_i32_1 = arith.constant 0 : i32
    return %c0_i32, %c0_i32_0 : i32, i32
  }
  func.func @transform_5(%arg0: i32) -> (i32, i32) {
    %c0_i32 = arith.constant 0 : i32
    %c0_i32_0 = arith.constant 0 : i32
    %c0_i32_1 = arith.constant 0 : i32
    return %c0_i32, %c0_i32_0 : i32, i32
  }
  func.func @transform_6(%arg0: i32) -> (i32, i32) {
    %c0_i32 = arith.constant 0 : i32
    %c0_i32_0 = arith.constant 0 : i32
    %c0_i32_1 = arith.constant 0 : i32
    return %c0_i32, %c0_i32_0 : i32, i32
  }
  func.func @transform_7(%arg0: i32) -> (i32, i32) {
    %c0_i32 = arith.constant 0 : i32
    %c0_i32_0 = arith.constant 0 : i32
    return %arg0, %c0_i32 : i32, i32
  }
}

</mosaic_0001>

<llo_original>
// kernel: mlp_forward.1
$region0: #{mlp_forward.1}
  #allocation0 [shape = 'u32[]', space=smem, size = 0x4, offset = 0x4, fixed_abs, tag = 'smem constant byte address 0x4 - core index']
  #allocation1 [shape = 'u32[144,128]{1,0:T(1,128)}', space=vmem, size = 0x12000, scoped, tag = 'internal scratch']
  %s0 = inlined_call_operand.vmem [shape: f32[2,784], index: 0, kind: input, shape index: {}]
  %s1 = inlined_call_operand.hbm [shape: bf16[784,128], index: 1, kind: input, shape index: {}]
  %s2 = inlined_call_operand.vmem [shape: f32[1,128], index: 2, kind: input, shape index: {}]
  %s3 = inlined_call_operand.vmem [shape: bf16[128,128], index: 3, kind: input, shape index: {}]
  %s4 = inlined_call_operand.vmem [shape: f32[1,128], index: 4, kind: input, shape index: {}]
  %s5 = inlined_call_operand.vmem [shape: bf16[128,16], index: 5, kind: input, shape index: {}]
  %s6 = inlined_call_operand.vmem [shape: f32[1,16], index: 6, kind: input, shape index: {}]
  %s7 = inlined_call_operand.hbm [shape: f32[2,16], index: 7, kind: output, shape index: {}]
  %s8 = sld [smem:[#allocation0]]
  $region42: #{mlp_forward.1} parent=0
    _
  %s10 = ssub.s32 1, %s8
  %s11 = scalar_select 0, %s10, %s8
  $region1: #{mlp_forward.1} parent=0
    #allocation2 [shape = 'u8[200704]{0}', space=vmem, size = 0x31000, scoped, tag = 'input window, operand 1, single buffered']
    #allocation3 [shape = 's32[1]{0}', space=sflag, size = 0x4, scoped, tag = 'scoped memory for mlp_forward.1']
    #allocation4 [shape = 's32[1]{0}', space=sflag, size = 0x4, scoped, tag = 'scoped memory for mlp_forward.1']
    #allocation5 [shape = 'u8[4096]{0}', space=vmem, size = 0x1000, scoped, tag = 'output window, operand 0, single buffered']
    %12 = vsyncpa [#allocation3], 0
    %13 = vsyncpa [#allocation4], 0
    // Predicated region
    $region2: #{mlp_forward.1} parent=1 // pred_check
      _
    $region3: #{mlp_forward.1} parent=1 // pred_check_branch
      %15 = sbr.rel (0) target = $region5
    $region4: #{mlp_forward.1} parent=1 // pred_region
      _
    $region5: #{mlp_forward.1} parent=1 // pred_fallthru
      _
    // Predicated region
    $region6: #{mlp_forward.1} parent=1 // pred_check
      _
    $region7: #{mlp_forward.1} parent=1 // pred_check_branch
      %17 = sbr.rel (0) target = $region9
    $region8: #{mlp_forward.1} parent=1 // pred_region
      %s19 = ssub.s32 6272, 6272
      %20 = vsyncadd [#allocation3], %s19
      %s21 = sshll.u32 [#allocation2], 4
      %s22 = int_to_ptr.vmem [resolvable:$true] %s21
      %27 = dma.hbm_to_vmem [thread:$0]  %s1, 6272, %s22, [#allocation3], 64, 64, 4
    $region9: #{mlp_forward.1} parent=1 // pred_fallthru
      _
    // Predicated region
    $region10: #{mlp_forward.1} parent=1 // pred_check
      _
    $region11: #{mlp_forward.1} parent=1 // pred_check_branch
      %29 = sbr.rel (0) target = $region13
    $region12: #{mlp_forward.1} parent=1 // pred_region
      _
    $region13: #{mlp_forward.1} parent=1 // pred_fallthru
      _
    // Predicated region
    $region14: #{mlp_forward.1} parent=1 // pred_check
      _
    $region15: #{mlp_forward.1} parent=1 // pred_check_branch
      %31 = sbr.rel (0) target = $region17
    $region16: #{mlp_forward.1} parent=1 // pred_region
      _
    $region17: #{mlp_forward.1} parent=1 // pred_fallthru
      _
    // Predicated region
    $region18: #{mlp_forward.1} parent=1 // pred_check
      _
    $region19: #{mlp_forward.1} parent=1 // pred_check_branch
      %33 = sbr.rel (0) target = $region21
    $region20: #{mlp_forward.1} parent=1 // pred_region
      _
    $region21: #{mlp_forward.1} parent=1 // pred_fallthru
      _
    // Predicated region
    $region22: #{mlp_forward.1} parent=1 // pred_check
      _
    $region23: #{mlp_forward.1} parent=1 // pred_check_branch
      %35 = sbr.rel (0) target = $region25
    $region24: #{mlp_forward.1} parent=1 // pred_region
      _
    $region25: #{mlp_forward.1} parent=1 // pred_fallthru
      _
    // Predicated region
    $region26: #{mlp_forward.1} parent=1 // pred_check
      _
    $region27: #{mlp_forward.1} parent=1 // pred_check_branch
      %37 = sbr.rel (0) target = $region29
    $region28: #{mlp_forward.1} parent=1 // pred_region
      _
    $region29: #{mlp_forward.1} parent=1 // pred_fallthru
      _
    // Predicated region
    $region30: #{mlp_forward.1} parent=1 // pred_check
      _
    $region31: #{mlp_forward.1} parent=1 // pred_check_branch
      %39 = sbr.rel (0) target = $region33
    $region32: #{mlp_forward.1} parent=1 // pred_region
      %40 = dma.done [#allocation3], 6272
    $region33: #{mlp_forward.1} parent=1 // pred_fallthru
      _
    %v42 = vld [vmem:[%s0] sm:$0xff]
    %v43 = vld [vmem:[%s0 + $0x8] sm:$0x3f]
    %v44 = vld [vmem:[%s0 + $0xe] sm:$0xff]
    %v45 = vld [vmem:[%s0 + $0x16] sm:$0x3f]
    %v46 = vld [vmem:[%s0 + $0x1c] sm:$0xff]
    %v47 = vld [vmem:[%s0 + $0x24] sm:$0x3f]
    %v48 = vld [vmem:[%s0 + $0x2a] sm:$0xff]
    %v49 = vld [vmem:[%s0 + $0x32] sm:$0x3f]
    %v58 = vcombine.low %v42, %v44
    %v59 = vcombine.high %v42, %v44
    %v60 = vcombine.low %v46, %v48
    %v61 = vcombine.high %v46, %v48
    %v63 = vunpack.c.l.s4 1983009808
    %v64 = vunpack.c.0.s8 %v63
    %v65 = vlaneseq
    %v66 = vshrl.u32 %v65, 7
    %v67 = vsub.s32 %v64, %v66
    %v68 = vrot.slane %v58, %v67
    %v70 = vunpack.c.l.s4 1983009808
    %v71 = vunpack.c.0.s8 %v70
    %v72 = vlaneseq
    %v73 = vshrl.u32 %v72, 7
    %v74 = vsub.s32 %v71, %v73
    %v75 = vrot.slane %v59, %v74
    %v77 = vunpack.c.l.s4 1983009808
    %v78 = vunpack.c.0.s8 %v77
    %v79 = vlaneseq
    %v80 = vshrl.u32 %v79, 7
    %v81 = vsub.s32 %v78, %v80
    %v82 = vrot.slane %v60, %v81
    %v84 = vunpack.c.l.s4 1983009808
    %v85 = vunpack.c.0.s8 %v84
    %v86 = vlaneseq
    %v87 = vshrl.u32 %v86, 7
    %v88 = vsub.s32 %v85, %v87
    %v89 = vrot.slane %v61, %v88
    %v90 = vcombine.low %v68, %v82
    %v91 = vcombine.high %v68, %v82
    %v92 = vcombine.low %v75, %v89
    %v93 = vcombine.high %v75, %v89
    %v94 = vcombine.low %v43, %v45
    %v95 = vcombine.high %v43, %v45
    %v96 = vcombine.low %v47, %v49
    %v97 = vcombine.high %v47, %v49
    %v99 = vunpack.c.l.s4 1983009808
    %v100 = vunpack.c.0.s8 %v99
    %v101 = vlaneseq
    %v102 = vshrl.u32 %v101, 7
    %v103 = vsub.s32 %v100, %v102
    %v104 = vrot.slane %v94, %v103
    %v106 = vunpack.c.l.s4 1983009808
    %v107 = vunpack.c.0.s8 %v106
    %v108 = vlaneseq
    %v109 = vshrl.u32 %v108, 7
    %v110 = vsub.s32 %v107, %v109
    %v111 = vrot.slane %v95, %v110
    %v113 = vunpack.c.l.s4 1983009808
    %v114 = vunpack.c.0.s8 %v113
    %v115 = vlaneseq
    %v116 = vshrl.u32 %v115, 7
    %v117 = vsub.s32 %v114, %v116
    %v118 = vrot.slane %v96, %v117
    %v120 = vunpack.c.l.s4 1983009808
    %v121 = vunpack.c.0.s8 %v120
    %v122 = vlaneseq
    %v123 = vshrl.u32 %v122, 7
    %v124 = vsub.s32 %v121, %v123
    %v125 = vrot.slane %v97, %v124
    %v126 = vcombine.low %v104, %v118
    %v127 = vcombine.high %v104, %v118
    %v128 = vcombine.low %v111, %v125
    %v136 = vpack.c.bf16 %v90, %v90
    %v137 = vpack.c.bf16 %v91, %v91
    %v138 = vpack.c.bf16 %v92, %v92
    %v139 = vpack.c.bf16 %v93, %v93
    %v140 = vpack.c.bf16 %v126, %v126
    %v141 = vpack.c.bf16 %v127, %v127
    %v142 = vpack.c.bf16 %v128, %v128
    %v143 = vld [vmem:[#allocation2] sm:$0xf]
    %v144 = vld [vmem:[#allocation2 + $0x4] sm:$0xf]
    %v145 = vld [vmem:[#allocation2 + $0x8] sm:$0xf]
    %v146 = vld [vmem:[#allocation2 + $0xc] sm:$0xf]
    %v147 = vld [vmem:[#allocation2 + $0x10] sm:$0xf]
    %v148 = vld [vmem:[#allocation2 + $0x14] sm:$0xf]
    %v149 = vld [vmem:[#allocation2 + $0x18] sm:$0xf]
    %v150 = vld [vmem:[#allocation2 + $0x1c] sm:$0xf]
    %v151 = vld [vmem:[#allocation2 + $0x20] sm:$0xf]
    %v152 = vld [vmem:[#allocation2 + $0x24] sm:$0xf]
    %v153 = vld [vmem:[#allocation2 + $0x28] sm:$0xf]
    %v154 = vld [vmem:[#allocation2 + $0x2c] sm:$0xf]
    %v155 = vld [vmem:[#allocation2 + $0x30] sm:$0xf]
    %v156 = vld [vmem:[#allocation2 + $0x34] sm:$0xf]
    %v157 = vld [vmem:[#allocation2 + $0x38] sm:$0xf]
    %v158 = vld [vmem:[#allocation2 + $0x3c] sm:$0xf]
    %v159 = vld [vmem:[#allocation2 + $0x40] sm:$0xf]
    %v160 = vld [vmem:[#allocation2 + $0x44] sm:$0xf]
    %v161 = vld [vmem:[#allocation2 + $0x48] sm:$0xf]
    %v162 = vld [vmem:[#allocation2 + $0x4c] sm:$0xf]
    %v163 = vld [vmem:[#allocation2 + $0x50] sm:$0xf]
    %v164 = vld [vmem:[#allocation2 + $0x54] sm:$0xf]
    %v165 = vld [vmem:[#allocation2 + $0x58] sm:$0xf]
    %v166 = vld [vmem:[#allocation2 + $0x5c] sm:$0xf]
    %v167 = vld [vmem:[#allocation2 + $0x60] sm:$0xf]
    %v168 = vld [vmem:[#allocation2 + $0x64] sm:$0xf]
    %v169 = vld [vmem:[#allocation2 + $0x68] sm:$0xf]
    %v170 = vld [vmem:[#allocation2 + $0x6c] sm:$0xf]
    %v171 = vld [vmem:[#allocation2 + $0x70] sm:$0xf]
    %v172 = vld [vmem:[#allocation2 + $0x74] sm:$0xf]
    %v173 = vld [vmem:[#allocation2 + $0x78] sm:$0xf]
    %v174 = vld [vmem:[#allocation2 + $0x7c] sm:$0xf]
    %v175 = vld [vmem:[#allocation2 + $0x80] sm:$0xf]
    %v176 = vld [vmem:[#allocation2 + $0x84] sm:$0xf]
    %v177 = vld [vmem:[#allocation2 + $0x88] sm:$0xf]
    %v178 = vld [vmem:[#allocation2 + $0x8c] sm:$0xf]
    %v179 = vld [vmem:[#allocation2 + $0x90] sm:$0xf]
    %v180 = vld [vmem:[#allocation2 + $0x94] sm:$0xf]
    %v181 = vld [vmem:[#allocation2 + $0x98] sm:$0xf]
    %v182 = vld [vmem:[#allocation2 + $0x9c] sm:$0xf]
    %v183 = vld [vmem:[#allocation2 + $0xa0] sm:$0xf]
    %v184 = vld [vmem:[#allocation2 + $0xa4] sm:$0xf]
    %v185 = vld [vmem:[#allocation2 + $0xa8] sm:$0xf]
    %v186 = vld [vmem:[#allocation2 + $0xac] sm:$0xf]
    %v187 = vld [vmem:[#allocation2 + $0xb0] sm:$0xf]
    %v188 = vld [vmem:[#allocation2 + $0xb4] sm:$0xf]
    %v189 = vld [vmem:[#allocation2 + $0xb8] sm:$0xf]
    %v190 = vld [vmem:[#allocation2 + $0xbc] sm:$0xf]
    %v191 = vld [vmem:[#allocation2 + $0xc0] sm:$0xf]
    %v192 = vld [vmem:[#allocation2 + $0xc4] sm:$0xf]
    %v193 = vld [vmem:[#allocation2 + $0xc8] sm:$0xf]
    %v194 = vld [vmem:[#allocation2 + $0xcc] sm:$0xf]
    %v195 = vld [vmem:[#allocation2 + $0xd0] sm:$0xf]
    %v196 = vld [vmem:[#allocation2 + $0xd4] sm:$0xf]
    %v197 = vld [vmem:[#allocation2 + $0xd8] sm:$0xf]
    %v198 = vld [vmem:[#allocation2 + $0xdc] sm:$0xf]
    %v199 = vld [vmem:[#allocation2 + $0xe0] sm:$0xf]
    %v200 = vld [vmem:[#allocation2 + $0xe4] sm:$0xf]
    %v201 = vld [vmem:[#allocation2 + $0xe8] sm:$0xf]
    %v202 = vld [vmem:[#allocation2 + $0xec] sm:$0xf]
    %v203 = vld [vmem:[#allocation2 + $0xf0] sm:$0xf]
    %v204 = vld [vmem:[#allocation2 + $0xf4] sm:$0xf]
    %v205 = vld [vmem:[#allocation2 + $0xf8] sm:$0xf]
    %v206 = vld [vmem:[#allocation2 + $0xfc] sm:$0xf]
    %v207 = vld [vmem:[#allocation2 + $0x100] sm:$0xf]
    %v208 = vld [vmem:[#allocation2 + $0x104] sm:$0xf]
    %v209 = vld [vmem:[#allocation2 + $0x108] sm:$0xf]
    %v210 = vld [vmem:[#allocation2 + $0x10c] sm:$0xf]
    %v211 = vld [vmem:[#allocation2 + $0x110] sm:$0xf]
    %v212 = vld [vmem:[#allocation2 + $0x114] sm:$0xf]
    %v213 = vld [vmem:[#allocation2 + $0x118] sm:$0xf]
    %v214 = vld [vmem:[#allocation2 + $0x11c] sm:$0xf]
    %v215 = vld [vmem:[#allocation2 + $0x120] sm:$0xf]
    %v216 = vld [vmem:[#allocation2 + $0x124] sm:$0xf]
    %v217 = vld [vmem:[#allocation2 + $0x128] sm:$0xf]
    %v218 = vld [vmem:[#allocation2 + $0x12c] sm:$0xf]
    %v219 = vld [vmem:[#allocation2 + $0x130] sm:$0xf]
    %v220 = vld [vmem:[#allocation2 + $0x134] sm:$0xf]
    %v221 = vld [vmem:[#allocation2 + $0x138] sm:$0xf]
    %v222 = vld [vmem:[#allocation2 + $0x13c] sm:$0xf]
    %v223 = vld [vmem:[#allocation2 + $0x140] sm:$0xf]
    %v224 = vld [vmem:[#allocation2 + $0x144] sm:$0xf]
    %v225 = vld [vmem:[#allocation2 + $0x148] sm:$0xf]
    %v226 = vld [vmem:[#allocation2 + $0x14c] sm:$0xf]
    %v227 = vld [vmem:[#allocation2 + $0x150] sm:$0xf]
    %v228 = vld [vmem:[#allocation2 + $0x154] sm:$0xf]
    %v229 = vld [vmem:[#allocation2 + $0x158] sm:$0xf]
    %v230 = vld [vmem:[#allocation2 + $0x15c] sm:$0xf]
    %v231 = vld [vmem:[#allocation2 + $0x160] sm:$0xf]
    %v232 = vld [vmem:[#allocation2 + $0x164] sm:$0xf]
    %v233 = vld [vmem:[#allocation2 + $0x168] sm:$0xf]
    %v234 = vld [vmem:[#allocation2 + $0x16c] sm:$0xf]
    %v235 = vld [vmem:[#allocation2 + $0x170] sm:$0xf]
    %v236 = vld [vmem:[#allocation2 + $0x174] sm:$0xf]
    %v237 = vld [vmem:[#allocation2 + $0x178] sm:$0xf]
    %v238 = vld [vmem:[#allocation2 + $0x17c] sm:$0xf]
    %v239 = vld [vmem:[#allocation2 + $0x180] sm:$0xf]
    %v240 = vld [vmem:[#allocation2 + $0x184] sm:$0xf]
    %v241 = vld [vmem:[%s2] sm:$0x1]
    %v243 = vlaneseq
    %v244 = vshrl.u32 %v243, 7
    %v245 = vsub.s32 0, %v244
    %v246 = vrot.slane %v241, %v245
    %v346 = vunpack.c.l.b16 %v143
    %v347 = vunpack.c.l.b16 %v144
    %v348 = vunpack.c.l.b16 %v145
    %v349 = vunpack.c.l.b16 %v146
    %v350 = vunpack.c.l.b16 %v147
    %v351 = vunpack.c.l.b16 %v148
    %v352 = vunpack.c.l.b16 %v149
    %v353 = vunpack.c.l.b16 %v150
    %v354 = vunpack.c.l.b16 %v151
    %v355 = vunpack.c.l.b16 %v152
    %v356 = vunpack.c.l.b16 %v153
    %v357 = vunpack.c.l.b16 %v154
    %v358 = vunpack.c.l.b16 %v155
    %v359 = vunpack.c.l.b16 %v156
    %v360 = vunpack.c.l.b16 %v157
    %v361 = vunpack.c.l.b16 %v158
    %v362 = vunpack.c.l.b16 %v159
    %v363 = vunpack.c.l.b16 %v160
    %v364 = vunpack.c.l.b16 %v161
    %v365 = vunpack.c.l.b16 %v162
    %v366 = vunpack.c.l.b16 %v163
    %v367 = vunpack.c.l.b16 %v164
    %v368 = vunpack.c.l.b16 %v165
    %v369 = vunpack.c.l.b16 %v166
    %v370 = vunpack.c.l.b16 %v167
    %v371 = vunpack.c.l.b16 %v168
    %v372 = vunpack.c.l.b16 %v169
    %v373 = vunpack.c.l.b16 %v170
    %v374 = vunpack.c.l.b16 %v171
    %v375 = vunpack.c.l.b16 %v172
    %v376 = vunpack.c.l.b16 %v173
    %v377 = vunpack.c.l.b16 %v174
    %v378 = vunpack.c.l.b16 %v175
    %v379 = vunpack.c.l.b16 %v176
    %v380 = vunpack.c.l.b16 %v177
    %v381 = vunpack.c.l.b16 %v178
    %v382 = vunpack.c.l.b16 %v179
    %v383 = vunpack.c.l.b16 %v180
    %v384 = vunpack.c.l.b16 %v181
    %v385 = vunpack.c.l.b16 %v182
    %v386 = vunpack.c.l.b16 %v183
    %v387 = vunpack.c.l.b16 %v184
    %v388 = vunpack.c.l.b16 %v185
    %v389 = vunpack.c.l.b16 %v186
    %v390 = vunpack.c.l.b16 %v187
    %v391 = vunpack.c.l.b16 %v188
    %v392 = vunpack.c.l.b16 %v189
    %v393 = vunpack.c.l.b16 %v190
    %v394 = vunpack.c.l.b16 %v191
    %v395 = vunpack.c.l.b16 %v192
    %v396 = vunpack.c.l.b16 %v193
    %v397 = vunpack.c.l.b16 %v194
    %v398 = vunpack.c.l.b16 %v195
    %v399 = vunpack.c.l.b16 %v196
    %v400 = vunpack.c.l.b16 %v197
    %v401 = vunpack.c.l.b16 %v198
    %v402 = vunpack.c.l.b16 %v199
    %v403 = vunpack.c.l.b16 %v200
    %v404 = vunpack.c.l.b16 %v201
    %v405 = vunpack.c.l.b16 %v202
    %v406 = vunpack.c.l.b16 %v203
    %v407 = vunpack.c.l.b16 %v204
    %v408 = vunpack.c.l.b16 %v205
    %v409 = vunpack.c.l.b16 %v206
    %v410 = vunpack.c.l.b16 %v207
    %v411 = vunpack.c.l.b16 %v208
    %v412 = vunpack.c.l.b16 %v209
    %v413 = vunpack.c.l.b16 %v210
    %v414 = vunpack.c.l.b16 %v211
    %v415 = vunpack.c.l.b16 %v212
    %v416 = vunpack.c.l.b16 %v213
    %v417 = vunpack.c.l.b16 %v214
    %v418 = vunpack.c.l.b16 %v215
    %v419 = vunpack.c.l.b16 %v216
    %v420 = vunpack.c.l.b16 %v217
    %v421 = vunpack.c.l.b16 %v218
    %v422 = vunpack.c.l.b16 %v219
    %v423 = vunpack.c.l.b16 %v220
    %v424 = vunpack.c.l.b16 %v221
    %v425 = vunpack.c.l.b16 %v222
    %v426 = vunpack.c.l.b16 %v223
    %v427 = vunpack.c.l.b16 %v224
    %v428 = vunpack.c.l.b16 %v225
    %v429 = vunpack.c.l.b16 %v226
    %v430 = vunpack.c.l.b16 %v227
    %v431 = vunpack.c.l.b16 %v228
    %v432 = vunpack.c.l.b16 %v229
    %v433 = vunpack.c.l.b16 %v230
    %v434 = vunpack.c.l.b16 %v231
    %v435 = vunpack.c.l.b16 %v232
    %v436 = vunpack.c.l.b16 %v233
    %v437 = vunpack.c.l.b16 %v234
    %v438 = vunpack.c.l.b16 %v235
    %v439 = vunpack.c.l.b16 %v236
    %v440 = vunpack.c.l.b16 %v237
    %v441 = vunpack.c.l.b16 %v238
    %v442 = vunpack.c.l.b16 %v239
    %v443 = vunpack.c.l.b16 %v240
    %v444 = vpack.c.b16 %v347, %v346
    %v445 = vpack.c.b16 %v349, %v348
    %v446 = vpack.c.b16 %v351, %v350
    %v447 = vpack.c.b16 %v353, %v352
    %v448 = vpack.c.b16 %v355, %v354
    %v449 = vpack.c.b16 %v357, %v356
    %v450 = vpack.c.b16 %v359, %v358
    %v451 = vpack.c.b16 %v361, %v360
    %v452 = vpack.c.b16 %v363, %v362
    %v453 = vpack.c.b16 %v365, %v364
    %v454 = vpack.c.b16 %v367, %v366
    %v455 = vpack.c.b16 %v369, %v368
    %v456 = vpack.c.b16 %v371, %v370
    %v457 = vpack.c.b16 %v373, %v372
    %v458 = vpack.c.b16 %v375, %v374
    %v459 = vpack.c.b16 %v377, %v376
    %v460 = vpack.c.b16 %v379, %v378
    %v461 = vpack.c.b16 %v381, %v380
    %v462 = vpack.c.b16 %v383, %v382
    %v463 = vpack.c.b16 %v385, %v384
    %v464 = vpack.c.b16 %v387, %v386
    %v465 = vpack.c.b16 %v389, %v388
    %v466 = vpack.c.b16 %v391, %v390
    %v467 = vpack.c.b16 %v393, %v392
    %v468 = vpack.c.b16 %v395, %v394
    %v469 = vpack.c.b16 %v397, %v396
    %v470 = vpack.c.b16 %v399, %v398
    %v471 = vpack.c.b16 %v401, %v400
    %v472 = vpack.c.b16 %v403, %v402
    %v473 = vpack.c.b16 %v405, %v404
    %v474 = vpack.c.b16 %v407, %v406
    %v475 = vpack.c.b16 %v409, %v408
    %v476 = vpack.c.b16 %v411, %v410
    %v477 = vpack.c.b16 %v413, %v412
    %v478 = vpack.c.b16 %v415, %v414
    %v479 = vpack.c.b16 %v417, %v416
    %v480 = vpack.c.b16 %v419, %v418
    %v481 = vpack.c.b16 %v421, %v420
    %v482 = vpack.c.b16 %v423, %v422
    %v483 = vpack.c.b16 %v425, %v424
    %v484 = vpack.c.b16 %v427, %v426
    %v485 = vpack.c.b16 %v429, %v428
    %v486 = vpack.c.b16 %v431, %v430
    %v487 = vpack.c.b16 %v433, %v432
    %v488 = vpack.c.b16 %v435, %v434
    %v489 = vpack.c.b16 %v437, %v436
    %v490 = vpack.c.b16 %v439, %v438
    %v491 = vpack.c.b16 %v441, %v440
    %v492 = vpack.c.b16 %v443, %v442
    %vm542 = vcmask 130048
    %v544 = vsel %vm542, %v142, 0
    %546 = vmatprep.subr.bf16.mxu0 0
    %547 = vmatpush1.bf16.msra.mxu0 %v451
    %548 = vmatprep.subr.bf16.mxu0 0
    %549 = vmatpush1.bf16.msra.mxu0 %v450
    %550 = vmatprep.subr.bf16.mxu0 0
    %551 = vmatpush1.bf16.msra.mxu0 %v449
    %552 = vmatprep.subr.bf16.mxu0 0
    %553 = vmatpush1.bf16.msra.mxu0 %v448
    %554 = vmatprep.subr.bf16.mxu0 0
    %555 = vmatpush1.bf16.msra.mxu0 %v447
    %556 = vmatprep.subr.bf16.mxu0 0
    %557 = vmatpush1.bf16.msra.mxu0 %v446
    %558 = vmatprep.subr.bf16.mxu0 0
    %559 = vmatpush1.bf16.msra.mxu0 %v445
    %560 = vmatprep.subr.bf16.mxu0 0
    %561 = vmatpush1.bf16.msra.mxu0 %v444
    %562 = vmatprep.subr.bf16.mxu0 0
    %563 = vmatpush2.bf16.msra.mxu0 %v459
    %564 = vmatprep.subr.bf16.mxu0 0
    %565 = vmatpush2.bf16.msra.mxu0 %v458
    %566 = vmatprep.subr.bf16.mxu0 0
    %567 = vmatpush2.bf16.msra.mxu0 %v457
    %568 = vmatprep.subr.bf16.mxu0 0
    %569 = vmatpush2.bf16.msra.mxu0 %v456
    %570 = vmatprep.subr.bf16.mxu0 0
    %571 = vmatpush2.bf16.msra.mxu0 %v455
    %572 = vmatprep.subr.bf16.mxu0 0
    %573 = vmatpush2.bf16.msra.mxu0 %v454
    %574 = vmatprep.subr.bf16.mxu0 0
    %575 = vmatpush2.bf16.msra.mxu0 %v453
    %576 = vmatprep.subr.bf16.mxu0 0
    %577 = vmatpush2.bf16.msra.mxu0 %v452
    %578 = vmatprep.mubr.bf16.mxu0 %v137
    %579 = vmatmul.mubr.bf16.gmra.mxu0 %v136
    %v580 = vpop.f32.mrf.mxu0
    %v581 = vadd.f32 %v246, %v580
    %v582 = vpop.f32.mrf.mxu0
    %v583 = vpop.f32.mrf.mxu0
    %v584 = vpop.f32.mrf.mxu0
    %585 = vdwg.mxu0
    %586 = vmatprep.subr.bf16.mxu0 0
    %587 = vmatpush1.bf16.msra.mxu0 %v467
    %588 = vmatprep.subr.bf16.mxu0 0
    %589 = vmatpush1.bf16.msra.mxu0 %v466
    %590 = vmatprep.subr.bf16.mxu0 0
    %591 = vmatpush1.bf16.msra.mxu0 %v465
    %592 = vmatprep.subr.bf16.mxu0 0
    %593 = vmatpush1.bf16.msra.mxu0 %v464
    %594 = vmatprep.subr.bf16.mxu0 0
    %595 = vmatpush1.bf16.msra.mxu0 %v463
    %596 = vmatprep.subr.bf16.mxu0 0
    %597 = vmatpush1.bf16.msra.mxu0 %v462
    %598 = vmatprep.subr.bf16.mxu0 0
    %599 = vmatpush1.bf16.msra.mxu0 %v461
    %600 = vmatprep.subr.bf16.mxu0 0
    %601 = vmatpush1.bf16.msra.mxu0 %v460
    %602 = vmatprep.subr.bf16.mxu0 0
    %603 = vmatpush2.bf16.msra.mxu0 %v475
    %604 = vmatprep.subr.bf16.mxu0 0
    %605 = vmatpush2.bf16.msra.mxu0 %v474
    %606 = vmatprep.subr.bf16.mxu0 0
    %607 = vmatpush2.bf16.msra.mxu0 %v473
    %608 = vmatprep.subr.bf16.mxu0 0
    %609 = vmatpush2.bf16.msra.mxu0 %v472
    %610 = vmatprep.subr.bf16.mxu0 0
    %611 = vmatpush2.bf16.msra.mxu0 %v471
    %612 = vmatprep.subr.bf16.mxu0 0
    %613 = vmatpush2.bf16.msra.mxu0 %v470
    %614 = vmatprep.subr.bf16.mxu0 0
    %615 = vmatpush2.bf16.msra.mxu0 %v469
    %616 = vmatprep.subr.bf16.mxu0 0
    %617 = vmatpush2.bf16.msra.mxu0 %v468
    %618 = vmatprep.mubr.bf16.mxu0 %v139
    %619 = vmatmul.mubr.bf16.gmra.mxu0 %v138
    %v620 = vpop.f32.mrf.mxu0
    %v621 = vadd.f32 %v581, %v620
    %v622 = vpop.f32.mrf.mxu0
    %v623 = vpop.f32.mrf.mxu0
    %v624 = vpop.f32.mrf.mxu0
    %625 = vdwg.mxu0
    %626 = vmatprep.subr.bf16.mxu0 0
    %627 = vmatpush1.bf16.msra.mxu0 %v483
    %628 = vmatprep.subr.bf16.mxu0 0
    %629 = vmatpush1.bf16.msra.mxu0 %v482
    %630 = vmatprep.subr.bf16.mxu0 0
    %631 = vmatpush1.bf16.msra.mxu0 %v481
    %632 = vmatprep.subr.bf16.mxu0 0
    %633 = vmatpush1.bf16.msra.mxu0 %v480
    %634 = vmatprep.subr.bf16.mxu0 0
    %635 = vmatpush1.bf16.msra.mxu0 %v479
    %636 = vmatprep.subr.bf16.mxu0 0
    %637 = vmatpush1.bf16.msra.mxu0 %v478
    %638 = vmatprep.subr.bf16.mxu0 0
    %639 = vmatpush1.bf16.msra.mxu0 %v477
    %640 = vmatprep.subr.bf16.mxu0 0
    %641 = vmatpush1.bf16.msra.mxu0 %v476
    %642 = vmatprep.subr.bf16.mxu0 0
    %643 = vmatpush2.bf16.msra.mxu0 %v491
    %644 = vmatprep.subr.bf16.mxu0 0
    %645 = vmatpush2.bf16.msra.mxu0 %v490
    %646 = vmatprep.subr.bf16.mxu0 0
    %647 = vmatpush2.bf16.msra.mxu0 %v489
    %648 = vmatprep.subr.bf16.mxu0 0
    %649 = vmatpush2.bf16.msra.mxu0 %v488
    %650 = vmatprep.subr.bf16.mxu0 0
    %651 = vmatpush2.bf16.msra.mxu0 %v487
    %652 = vmatprep.subr.bf16.mxu0 0
    %653 = vmatpush2.bf16.msra.mxu0 %v486
    %654 = vmatprep.subr.bf16.mxu0 0
    %655 = vmatpush2.bf16.msra.mxu0 %v485
    %656 = vmatprep.subr.bf16.mxu0 0
    %657 = vmatpush2.bf16.msra.mxu0 %v484
    %658 = vmatprep.mubr.bf16.mxu0 %v141
    %659 = vmatmul.mubr.bf16.gmra.mxu0 %v140
    %v660 = vpop.f32.mrf.mxu0
    %v661 = vadd.f32 %v621, %v660
    %v662 = vpop.f32.mrf.mxu0
    %v663 = vpop.f32.mrf.mxu0
    %v664 = vpop.f32.mrf.mxu0
    %665 = vdwg.mxu0
    %666 = vmatprep.subr.bf16.mxu0 0
    %667 = vmatpush1.bf16.msra.mxu0 0
    %668 = vmatprep.subr.bf16.mxu0 0
    %669 = vmatpush1.bf16.msra.mxu0 0
    %670 = vmatprep.subr.bf16.mxu0 0
    %671 = vmatpush1.bf16.msra.mxu0 0
    %672 = vmatprep.subr.bf16.mxu0 0
    %673 = vmatpush1.bf16.msra.mxu0 0
    %674 = vmatprep.subr.bf16.mxu0 0
    %675 = vmatpush1.bf16.msra.mxu0 0
    %676 = vmatprep.subr.bf16.mxu0 0
    %677 = vmatpush1.bf16.msra.mxu0 0
    %678 = vmatprep.subr.bf16.mxu0 0
    %679 = vmatpush1.bf16.msra.mxu0 0
    %680 = vmatprep.subr.bf16.mxu0 0
    %681 = vmatpush1.bf16.msra.mxu0 %v492
    %682 = vmatprep.subr.bf16.mxu0 0
    %683 = vmatpush2.bf16.msra.mxu0 0
    %684 = vmatprep.subr.bf16.mxu0 0
    %685 = vmatpush2.bf16.msra.mxu0 0
    %686 = vmatprep.subr.bf16.mxu0 0
    %687 = vmatpush2.bf16.msra.mxu0 0
    %688 = vmatprep.subr.bf16.mxu0 0
    %689 = vmatpush2.bf16.msra.mxu0 0
    %690 = vmatprep.subr.bf16.mxu0 0
    %691 = vmatpush2.bf16.msra.mxu0 0
    %692 = vmatprep.subr.bf16.mxu0 0
    %693 = vmatpush2.bf16.msra.mxu0 0
    %694 = vmatprep.subr.bf16.mxu0 0
    %695 = vmatpush2.bf16.msra.mxu0 0
    %696 = vmatprep.subr.bf16.mxu0 0
    %697 = vmatpush2.bf16.msra.mxu0 0
    %698 = vmatprep.mubr.bf16.mxu0 0
    %699 = vmatmul.mubr.bf16.gmra.mxu0 %v544
    %v700 = vpop.f32.mrf.mxu0
    %v701 = vadd.f32 %v661, %v700
    %v702 = vpop.f32.mrf.mxu0
    %v703 = vpop.f32.mrf.mxu0
    %v704 = vpop.f32.mrf.mxu0
    %705 = vdwg.mxu0
    %v706 = vmax.f32 %v701, 0.0
    %v707 = vpack.c.bf16 %v706, %v706
    %v708 = vld [vmem:[%s3] sm:$0xf]
    %v709 = vld [vmem:[%s3 + $0x4] sm:$0xf]
    %v710 = vld [vmem:[%s3 + $0x8] sm:$0xf]
    %v711 = vld [vmem:[%s3 + $0xc] sm:$0xf]
    %v712 = vld [vmem:[%s3 + $0x10] sm:$0xf]
    %v713 = vld [vmem:[%s3 + $0x14] sm:$0xf]
    %v714 = vld [vmem:[%s3 + $0x18] sm:$0xf]
    %v715 = vld [vmem:[%s3 + $0x1c] sm:$0xf]
    %v716 = vld [vmem:[%s3 + $0x20] sm:$0xf]
    %v717 = vld [vmem:[%s3 + $0x24] sm:$0xf]
    %v718 = vld [vmem:[%s3 + $0x28] sm:$0xf]
    %v719 = vld [vmem:[%s3 + $0x2c] sm:$0xf]
    %v720 = vld [vmem:[%s3 + $0x30] sm:$0xf]
    %v721 = vld [vmem:[%s3 + $0x34] sm:$0xf]
    %v722 = vld [vmem:[%s3 + $0x38] sm:$0xf]
    %v723 = vld [vmem:[%s3 + $0x3c] sm:$0xf]
    %v724 = vld [vmem:[%s4] sm:$0x1]
    %v726 = vlaneseq
    %v727 = vshrl.u32 %v726, 7
    %v728 = vsub.s32 0, %v727
    %v729 = vrot.slane %v724, %v728
    %v747 = vunpack.c.l.b16 %v708
    %v748 = vunpack.c.l.b16 %v709
    %v749 = vunpack.c.l.b16 %v710
    %v750 = vunpack.c.l.b16 %v711
    %v751 = vunpack.c.l.b16 %v712
    %v752 = vunpack.c.l.b16 %v713
    %v753 = vunpack.c.l.b16 %v714
    %v754 = vunpack.c.l.b16 %v715
    %v755 = vunpack.c.l.b16 %v716
    %v756 = vunpack.c.l.b16 %v717
    %v757 = vunpack.c.l.b16 %v718
    %v758 = vunpack.c.l.b16 %v719
    %v759 = vunpack.c.l.b16 %v720
    %v760 = vunpack.c.l.b16 %v721
    %v761 = vunpack.c.l.b16 %v722
    %v762 = vunpack.c.l.b16 %v723
    %v763 = vpack.c.b16 %v748, %v747
    %v764 = vpack.c.b16 %v750, %v749
    %v765 = vpack.c.b16 %v752, %v751
    %v766 = vpack.c.b16 %v754, %v753
    %v767 = vpack.c.b16 %v756, %v755
    %v768 = vpack.c.b16 %v758, %v757
    %v769 = vpack.c.b16 %v760, %v759
    %v770 = vpack.c.b16 %v762, %v761
    %779 = vmatprep.subr.bf16.mxu0 0
    %780 = vmatpush1.bf16.msra.mxu0 %v770
    %781 = vmatprep.subr.bf16.mxu0 0
    %782 = vmatpush1.bf16.msra.mxu0 %v769
    %783 = vmatprep.subr.bf16.mxu0 0
    %784 = vmatpush1.bf16.msra.mxu0 %v768
    %785 = vmatprep.subr.bf16.mxu0 0
    %786 = vmatpush1.bf16.msra.mxu0 %v767
    %787 = vmatprep.subr.bf16.mxu0 0
    %788 = vmatpush1.bf16.msra.mxu0 %v766
    %789 = vmatprep.subr.bf16.mxu0 0
    %790 = vmatpush1.bf16.msra.mxu0 %v765
    %791 = vmatprep.subr.bf16.mxu0 0
    %792 = vmatpush1.bf16.msra.mxu0 %v764
    %793 = vmatprep.subr.bf16.mxu0 0
    %794 = vmatpush1.bf16.msra.mxu0 %v763
    %795 = vmatprep.subr.bf16.mxu0 0
    %796 = vmatpush2.bf16.msra.mxu0 0
    %797 = vmatprep.subr.bf16.mxu0 0
    %798 = vmatpush2.bf16.msra.mxu0 0
    %799 = vmatprep.subr.bf16.mxu0 0
    %800 = vmatpush2.bf16.msra.mxu0 0
    %801 = vmatprep.subr.bf16.mxu0 0
    %802 = vmatpush2.bf16.msra.mxu0 0
    %803 = vmatprep.subr.bf16.mxu0 0
    %804 = vmatpush2.bf16.msra.mxu0 0
    %805 = vmatprep.subr.bf16.mxu0 0
    %806 = vmatpush2.bf16.msra.mxu0 0
    %807 = vmatprep.subr.bf16.mxu0 0
    %808 = vmatpush2.bf16.msra.mxu0 0
    %809 = vmatprep.subr.bf16.mxu0 0
    %810 = vmatpush2.bf16.msra.mxu0 0
    %811 = vmatprep.mubr.bf16.mxu0 0
    %812 = vmatmul.mubr.bf16.gmra.mxu0 %v707
    %v813 = vpop.f32.mrf.mxu0
    %v814 = vadd.f32 %v729, %v813
    %v815 = vpop.f32.mrf.mxu0
    %v816 = vpop.f32.mrf.mxu0
    %v817 = vpop.f32.mrf.mxu0
    %818 = vdwg.mxu0
    %v819 = vmax.f32 %v814, 0.0
    %v820 = vpack.c.bf16 %v819, %v819
    %v821 = vld [vmem:[%s5] sm:$0xf]
    %v822 = vld [vmem:[%s5 + $0x4] sm:$0xf]
    %v823 = vld [vmem:[%s5 + $0x8] sm:$0xf]
    %v824 = vld [vmem:[%s5 + $0xc] sm:$0xf]
    %v825 = vld [vmem:[%s5 + $0x10] sm:$0xf]
    %v826 = vld [vmem:[%s5 + $0x14] sm:$0xf]
    %v827 = vld [vmem:[%s5 + $0x18] sm:$0xf]
    %v828 = vld [vmem:[%s5 + $0x1c] sm:$0xf]
    %v829 = vld [vmem:[%s5 + $0x20] sm:$0xf]
    %v830 = vld [vmem:[%s5 + $0x24] sm:$0xf]
    %v831 = vld [vmem:[%s5 + $0x28] sm:$0xf]
    %v832 = vld [vmem:[%s5 + $0x2c] sm:$0xf]
    %v833 = vld [vmem:[%s5 + $0x30] sm:$0xf]
    %v834 = vld [vmem:[%s5 + $0x34] sm:$0xf]
    %v835 = vld [vmem:[%s5 + $0x38] sm:$0xf]
    %v836 = vld [vmem:[%s5 + $0x3c] sm:$0xf]
    %v837 = vld [vmem:[%s6] sm:$0x1]
    %v839 = vlaneseq
    %v840 = vshrl.u32 %v839, 7
    %v841 = vsub.s32 0, %v840
    %v842 = vrot.slane %v837, %v841
    %v860 = vunpack.c.l.b16 %v821
    %v861 = vunpack.c.l.b16 %v822
    %v862 = vunpack.c.l.b16 %v823
    %v863 = vunpack.c.l.b16 %v824
    %v864 = vunpack.c.l.b16 %v825
    %v865 = vunpack.c.l.b16 %v826
    %v866 = vunpack.c.l.b16 %v827
    %v867 = vunpack.c.l.b16 %v828
    %v868 = vunpack.c.l.b16 %v829
    %v869 = vunpack.c.l.b16 %v830
    %v870 = vunpack.c.l.b16 %v831
    %v871 = vunpack.c.l.b16 %v832
    %v872 = vunpack.c.l.b16 %v833
    %v873 = vunpack.c.l.b16 %v834
    %v874 = vunpack.c.l.b16 %v835
    %v875 = vunpack.c.l.b16 %v836
    %v876 = vpack.c.b16 %v861, %v860
    %v877 = vpack.c.b16 %v863, %v862
    %v878 = vpack.c.b16 %v865, %v864
    %v879 = vpack.c.b16 %v867, %v866
    %v880 = vpack.c.b16 %v869, %v868
    %v881 = vpack.c.b16 %v871, %v870
    %v882 = vpack.c.b16 %v873, %v872
    %v883 = vpack.c.b16 %v875, %v874
    %892 = vmatprep.subr.bf16.mxu0 0
    %893 = vmatpush1.bf16.msra.mxu0 %v883
    %894 = vmatprep.subr.bf16.mxu0 0
    %895 = vmatpush1.bf16.msra.mxu0 %v882
    %896 = vmatprep.subr.bf16.mxu0 0
    %897 = vmatpush1.bf16.msra.mxu0 %v881
    %898 = vmatprep.subr.bf16.mxu0 0
    %899 = vmatpush1.bf16.msra.mxu0 %v880
    %900 = vmatprep.subr.bf16.mxu0 0
    %901 = vmatpush1.bf16.msra.mxu0 %v879
    %902 = vmatprep.subr.bf16.mxu0 0
    %903 = vmatpush1.bf16.msra.mxu0 %v878
    %904 = vmatprep.subr.bf16.mxu0 0
    %905 = vmatpush1.bf16.msra.mxu0 %v877
    %906 = vmatprep.subr.bf16.mxu0 0
    %907 = vmatpush1.bf16.msra.mxu0 %v876
    %908 = vmatprep.subr.bf16.mxu0 0
    %909 = vmatpush2.bf16.msra.mxu0 0
    %910 = vmatprep.subr.bf16.mxu0 0
    %911 = vmatpush2.bf16.msra.mxu0 0
    %912 = vmatprep.subr.bf16.mxu0 0
    %913 = vmatpush2.bf16.msra.mxu0 0
    %914 = vmatprep.subr.bf16.mxu0 0
    %915 = vmatpush2.bf16.msra.mxu0 0
    %916 = vmatprep.subr.bf16.mxu0 0
    %917 = vmatpush2.bf16.msra.mxu0 0
    %918 = vmatprep.subr.bf16.mxu0 0
    %919 = vmatpush2.bf16.msra.mxu0 0
    %920 = vmatprep.subr.bf16.mxu0 0
    %921 = vmatpush2.bf16.msra.mxu0 0
    %922 = vmatprep.subr.bf16.mxu0 0
    %923 = vmatpush2.bf16.msra.mxu0 0
    %924 = vmatprep.mubr.bf16.mxu0 0
    %925 = vmatmul.mubr.bf16.gmra.mxu0 %v820
    %v926 = vpop.f32.mrf.mxu0
    %v927 = vadd.f32 %v842, %v926
    %v928 = vpop.f32.mrf.mxu0
    %v929 = vpop.f32.mrf.mxu0
    %v930 = vpop.f32.mrf.mxu0
    %931 = vdwg.mxu0
    %932 = vst.msk [vmem:[#allocation5] sm:$0xff] %vm542, %v927
    // Predicated region
    $region34: #{mlp_forward.1} parent=1 // pred_check
      _
    $region35: #{mlp_forward.1} parent=1 // pred_check_branch
      %934 = sbr.rel (0) target = $region37
    $region36: #{mlp_forward.1} parent=1 // pred_region
      %s936 = ssub.s32 128, 32
      %937 = vsyncadd [#allocation4], %s936
      %s938 = sshll.u32 [#allocation5], 4
      %s939 = int_to_ptr.vmem [resolvable:$true] %s938
      %944 = dma.vmem_to_hbm [thread:$0]  %s939, 32, %s7, [#allocation4], 32, 32, 2
    $region37: #{mlp_forward.1} parent=1 // pred_fallthru
      _
    // Predicated region
    $region38: #{mlp_forward.1} parent=1 // pred_check
      _
    $region39: #{mlp_forward.1} parent=1 // pred_check_branch
      %946 = sbr.rel (0) target = $region41
    $region40: #{mlp_forward.1} parent=1 // pred_region
      %947 = dma.done [#allocation4], 128
    $region41: #{mlp_forward.1} parent=1 // pred_fallthru
      _
    %948 = vsyncpa [#allocation3], 1
    %949 = vsyncpa [#allocation4], 1

</llo_original>
